<compile_context>
chip_gen: v5e
topology: v5e:2x2
jax: 0.10.0
libtpu: 0.0.40
codegen_flags: <defaults>
</compile_context>

<pallas_src>
import functools

import jax
import jax.numpy as jnp
from jax.experimental import pallas as pl
from jax.experimental.pallas import tpu as pltpu


def _round_up(v, m):
    return ((v + m - 1) // m) * m


def _choose_block_rows(n, c, itemsize, vmem_budget_bytes):
    """Rows per tile so that all VMEM-resident blocks fit the buffer budget."""
    c_pad = _round_up(max(int(c), 1), 128)          # lane padding of the logits tile
    per_row = (
        2 * c_pad * itemsize        # double-buffered logits tile (native dtype)
        + c_pad * 4                 # f32 upcast / elementwise temporaries
        + 2 * 128 * 4               # double-buffered packed (tn, 2) alpha/target tile (lane-padded)
        + 2 * 128 * 4               # resident (tn, 1) f32 partial-sum output block
    )
    tn = max(8, vmem_budget_bytes // per_row)
    tn = min(tn, 8192)              # keep per-step latency modest; pipelining hides the rest
    tn = min(tn, _round_up(n, 8))
    align = 16 if itemsize == 2 else 8   # bf16 native sublane tile is (16, 128)
    if tn > align:
        tn = (tn // align) * align
    return int(max(tn, 8))


def _focal_loss_kernel(n_ref, x_ref, at_ref, out_ref, *, gamma):
    p = pl.program_id(0)            # "parallel" (megacore) axis
    i = pl.program_id(1)            # "arbitrary" (reduction) axis
    n_inner = pl.num_programs(1)

    @pl.when(i == 0)
    def _():
        out_ref[...] = jnp.zeros_like(out_ref)

    x = x_ref[...].astype(jnp.float32)            # (TN, C) native-dtype DMA, f32 cast in VMEM
    alpha_n = at_ref[:, 0:1]                      # (TN, 1) alpha pre-gathered in the wrapper
    t_i = at_ref[:, 1:2].astype(jnp.int32)        # (TN, 1) target id (stored as exact f32)

    tn, c = x.shape
    col = jax.lax.broadcasted_iota(jnp.int32, (tn, c), 1)
    hit = col == t_i                              # one-hot mask, never materialized as f32

    m = jnp.max(x, axis=1, keepdims=True)                              # (TN, 1)
    x_t = jnp.sum(jnp.where(hit, x, 0.0), axis=1, keepdims=True)       # target logit
    e = jnp.exp(x - m)                                                 # (TN, C)
    sum_not = jnp.sum(jnp.where(hit, 0.0, e), axis=1, keepdims=True)   # non-target mass
    e_t = jnp.exp(x_t - m)                                             # (TN, 1)
    sum_e = sum_not + e_t

    log_p = (x_t - m) - jnp.log(sum_e)            # finite even if the target prob underflows
    q = sum_not / sum_e                           # 1 - p without cancellation when p -> 1

    g = float(gamma)
    if g == float(int(g)) and int(g) >= 0:
        pw = jnp.ones_like(q)
        for _ in range(int(g)):                   # gamma = 2 -> two VPU multiplies
            pw = pw * q
    else:
        pw = jnp.exp(g * jnp.log(q))              # EUP path for non-integer gamma

    batch_loss = -alpha_n * pw * log_p            # (TN, 1)

    # zero padded tail rows of the last tile and clamped duplicate tiles
    t_idx = p * n_inner + i
    row = t_idx * tn + jax.lax.broadcasted_iota(jnp.int32, (tn, 1), 0)
    batch_loss = jnp.where(row < n_ref[0], batch_loss, 0.0)

    # per-row partial sums; collapsed to a scalar (and scaled) in the wrapper
    out_ref[...] += batch_loss
    # TODO(synk): if a v7x bundle dump shows the (TN,C) row reductions saturating
    # the XLU, offload them to the idle MXU via a ones-matrix matmul.


def focal_loss_self(inputs, targets, alpha=None, gamma=2.0, size_average=True,
                    max_block_rows=None, vmem_budget_bytes=12 * 1024 * 1024):
    """JAX/Pallas equivalent of FocalLossSelf.forward.

    inputs : (N, C) float logits (any float dtype; cast to f32 inside the kernel)
    targets: (N,)   int class ids in [0, C)   (requires C < 2**24)
    alpha  : (C,) or (C, 1) per-class weights; defaults to ones (as in __init__)
    """
    inputs = jnp.asarray(inputs)                  # keep native dtype in HBM
    n, c = inputs.shape

    if alpha is None:
        alpha = jnp.ones((c,), dtype=jnp.float32)
    alpha_flat = jnp.asarray(alpha, dtype=jnp.float32).reshape(-1)

    targets = jnp.asarray(targets, dtype=jnp.int32).reshape(-1)
    # hoisted alpha gather + lane-dense packing: one (N, 2) f32 array [alpha_n | target]
    alpha_n = alpha_flat[targets]
    at = jnp.stack([alpha_n, targets.astype(jnp.float32)], axis=1)    # (N, 2)

    itemsize = jnp.dtype(inputs.dtype).itemsize
    tn = _choose_block_rows(n, c, itemsize, vmem_budget_bytes)
    if max_block_rows is not None:
        tn = int(min(tn, _round_up(int(max_block_rows), 8)))

    n_tiles = pl.cdiv(n, tn)
    n_cores = 2 if n_tiles >= 2 else 1            # leading "parallel" axis (v7x megacore)
    inner = pl.cdiv(n_tiles, n_cores)
    last_tile = n_tiles - 1

    def row_map(p, i, n_sref, _inner=inner, _last=last_tile):
        return (jnp.minimum(p * _inner + i, _last), 0)

    def out_map(p, i, n_sref):
        return (p, 0)

    n_arr = jnp.array([n], dtype=jnp.int32)

    partials = pl.pallas_call(
        functools.partial(_focal_loss_kernel, gamma=float(gamma)),
        out_shape=jax.ShapeDtypeStruct((n_cores * tn, 1), jnp.float32),
        grid_spec=pltpu.PrefetchScalarGridSpec(
            num_scalar_prefetch=1,
            grid=(n_cores, inner),
            in_specs=[
                pl.BlockSpec((tn, c), row_map),   # logits tile (native dtype DMA)
                pl.BlockSpec((tn, 2), row_map),   # packed [alpha_n, target] tile
            ],
            out_specs=pl.BlockSpec((tn, 1), out_map),
        ),
        compiler_params=pltpu.CompilerParams(
            dimension_semantics=("parallel", "arbitrary"),
            vmem_limit_bytes=32 * 1024 * 1024,    # explicit scoped-VMEM limit (safe on v5e/v6e/v7x)
        ),
    )(n_arr, inputs, at)

    total = jnp.sum(partials)
    return total / n if size_average else total


def _reference(inputs, targets, alpha, gamma, size_average):
    # pure-JAX reference mirroring the PyTorch code
    x = jnp.asarray(inputs, dtype=jnp.float32)
    p = jax.nn.softmax(x, axis=1)
    mask = jax.nn.one_hot(targets, x.shape[1], dtype=jnp.float32)
    probs = jnp.sum(p * mask, axis=1, keepdims=True)
    alpha_n = jnp.asarray(alpha, jnp.float32).reshape(-1)[targets].reshape(-1, 1)
    batch_loss = -alpha_n * jnp.power(1.0 - probs, gamma) * jnp.log(probs)
    return jnp.mean(batch_loss) if size_average else jnp.sum(batch_loss)


if __name__ == "__main__":
    key = jax.random.PRNGKey(0)
    ks = jax.random.split(key, 8)

    # --- test 1: default module config (alpha = ones(C,1), gamma = 2, mean) ---
    N, C = 8, 32
    x1 = jax.random.normal(ks[0], (N, C), dtype=jnp.float32)
    t1 = jax.random.randint(ks[1], (N,), 0, C, dtype=jnp.int32)
    a1 = jnp.ones((C, 1), dtype=jnp.float32)
    got1 = jax.block_until_ready(
        focal_loss_self(x1, t1, alpha=a1, gamma=2.0, size_average=True))
    ref1 = _reference(x1, t1, a1, 2.0, True)
    assert jnp.allclose(got1, ref1, rtol=1e-5, atol=1e-6), (got1, ref1)

    # --- test 2: ragged batch (tail masking), non-uniform alpha, sum reduction ---
    N2, C2 = 11, 32
    x2 = jax.random.normal(ks[2], (N2, C2), dtype=jnp.float32)
    t2 = jax.random.randint(ks[3], (N2,), 0, C2, dtype=jnp.int32)
    a2 = jax.random.uniform(ks[4], (C2,), dtype=jnp.float32) + 0.5
    got2 = jax.block_until_ready(
        focal_loss_self(x2, t2, alpha=a2, gamma=2.0, size_average=False))
    ref2 = _reference(x2, t2, a2, 2.0, False)
    assert jnp.allclose(got2, ref2, rtol=1e-5, atol=1e-5), (got2, ref2)

    # --- test 3: multi-tile + dual-core split + clamped tail tile (forced small tiles) ---
    N3, C3 = 270, 32
    x3 = jax.random.normal(ks[5], (N3, C3), dtype=jnp.float32) * 3.0
    t3 = jax.random.randint(ks[6], (N3,), 0, C3, dtype=jnp.int32)
    a3 = jax.random.uniform(ks[7], (C3,), dtype=jnp.float32) + 0.5
    got3 = jax.block_until_ready(
        focal_loss_self(x3, t3, alpha=a3, gamma=2.0, size_average=True,
                        max_block_rows=32))
    ref3 = _reference(x3, t3, a3, 2.0, True)
    assert jnp.allclose(got3, ref3, rtol=1e-5, atol=1e-5), (got3, ref3)

    # --- test 4: bf16 logits (native-dtype DMA + f32 cast) and non-integer gamma ---
    N4, C4 = 64, 48
    x4 = jax.random.normal(ks[0], (N4, C4), dtype=jnp.float32).astype(jnp.bfloat16)
    t4 = jax.random.randint(ks[1], (N4,), 0, C4, dtype=jnp.int32)
    got4 = jax.block_until_ready(
        focal_loss_self(x4, t4, alpha=None, gamma=1.5, size_average=True))
    ref4 = _reference(x4.astype(jnp.float32), t4, jnp.ones((C4,)), 1.5, True)
    assert jnp.allclose(got4, ref4, rtol=1e-4, atol=1e-5), (got4, ref4)

    print("KERNEL_OK")
</pallas_src>

<mosaic_0001>
module attributes {stable_mosaic.version = 11 : i64} {
  func.func @_focal_loss_kernel(%arg0: i32, %arg1: i32, %arg2: memref<1xi32, #tpu.memory_space<smem>>, %arg3: memref<8x32xf32, #tpu.memory_space<vmem>>, %arg4: memref<8x2xf32, #tpu.memory_space<vmem>>, %arg5: memref<8x1xf32, #tpu.memory_space<vmem>>) attributes {dimension_semantics = [#tpu.dimension_semantics<parallel>, #tpu.dimension_semantics<arbitrary>], iteration_bounds = array<i64: 1, 1>, scalar_prefetch = 1 : i64, scratch_operands = 0 : i64, tpu.core_type = #tpu.core_type<tc>, window_params = [{transform_indices = @transform_0, window_bounds = array<i64: 8, 32>}, {transform_indices = @transform_1, window_bounds = array<i64: 8, 2>}, {transform_indices = @transform_2, window_bounds = array<i64: 8, 1>}]} {
    %c0_i32 = arith.constant 0 : i32
    %0 = arith.cmpi eq, %arg1, %c0_i32 : i32
    %1 = arith.extui %0 : i1 to i32
    %c0_i32_0 = arith.constant 0 : i32
    %2 = arith.cmpi ne, %1, %c0_i32_0 : i32
    scf.if %2 {
      %cst_17 = arith.constant 0.000000e+00 : f32
      %51 = vector.broadcast %cst_17 : f32 to vector<8x1xf32>
      %c0_18 = arith.constant 0 : index
      %c0_19 = arith.constant 0 : index
      %52 = vector.load %arg5[%c0_18, %c0_19] : memref<8x1xf32, #tpu.memory_space<vmem>>, vector<8x1xf32>
      tpu.vector_store %arg5[%c0_18, %c0_19], %51 {strides = array<i32>} : memref<8x1xf32, #tpu.memory_space<vmem>>, vector<8x1xf32>,
    } else {
    }
    %c0 = arith.constant 0 : index
    %c0_1 = arith.constant 0 : index
    %3 = vector.load %arg3[%c0, %c0_1] : memref<8x32xf32, #tpu.memory_space<vmem>>, vector<8x32xf32>
    %c0_2 = arith.constant 0 : index
    %c0_3 = arith.constant 0 : index
    %4 = vector.load %arg4[%c0_2, %c0_3] : memref<8x2xf32, #tpu.memory_space<vmem>>, vector<8x1xf32>
    %c0_4 = arith.constant 0 : index
    %c1 = arith.constant 1 : index
    %5 = vector.load %arg4[%c0_4, %c1] : memref<8x2xf32, #tpu.memory_space<vmem>>, vector<8x1xf32>
    %6 = arith.fptosi %5 : vector<8x1xf32> to vector<8x1xi32>
    %7 = tpu.iota {dimensions = array<i32: 1>} : vector<8x32xi32>
    %8 = vector.broadcast %6 : vector<8x1xi32> to vector<8x32xi32>
    %9 = arith.cmpi eq, %7, %8 : vector<8x32xi32>
    %cst = arith.constant dense<0xFF800000> : vector<8xf32>
    %10 = vector.multi_reduction <maximumf>, %3, %cst [1] : vector<8x32xf32> to vector<8xf32>
    %11 = vector.shape_cast %10 : vector<8xf32> to vector<8x1xf32>
    %cst_5 = arith.constant 0.000000e+00 : f32
    %12 = vector.broadcast %cst_5 : f32 to vector<8x32xf32>
    %13 = arith.select %9, %3, %12 : vector<8x32xi1>, vector<8x32xf32>
    %cst_6 = arith.constant dense<0.000000e+00> : vector<8xf32>
    %14 = vector.multi_reduction <add>, %13, %cst_6 [1] : vector<8x32xf32> to vector<8xf32>
    %15 = vector.shape_cast %14 : vector<8xf32> to vector<8x1xf32>
    %16 = vector.broadcast %11 : vector<8x1xf32> to vector<8x32xf32>
    %17 = arith.subf %3, %16 : vector<8x32xf32>
    %18 = math.exp %17 : vector<8x32xf32>
    %cst_7 = arith.constant 0.000000e+00 : f32
    %19 = vector.broadcast %cst_7 : f32 to vector<8x32xf32>
    %20 = arith.select %9, %19, %18 : vector<8x32xi1>, vector<8x32xf32>
    %cst_8 = arith.constant dense<0.000000e+00> : vector<8xf32>
    %21 = vector.multi_reduction <add>, %20, %cst_8 [1] : vector<8x32xf32> to vector<8xf32>
    %22 = vector.shape_cast %21 : vector<8xf32> to vector<8x1xf32>
    %23 = arith.subf %15, %11 : vector<8x1xf32>
    %24 = math.exp %23 : vector<8x1xf32>
    %25 = arith.addf %22, %24 : vector<8x1xf32>
    %26 = arith.subf %15, %11 : vector<8x1xf32>
    %27 = math.log %25 : vector<8x1xf32>
    %28 = arith.subf %26, %27 : vector<8x1xf32>
    %29 = arith.divf %22, %25 : vector<8x1xf32>
    %cst_9 = arith.constant 1.000000e+00 : f32
    %30 = vector.broadcast %cst_9 : f32 to vector<8x1xf32>
    %31 = arith.mulf %30, %29 : vector<8x1xf32>
    %32 = arith.mulf %31, %29 : vector<8x1xf32>
    %cst_10 = arith.constant 0.000000e+00 : f32
    %33 = vector.broadcast %cst_10 : f32 to vector<8x1xf32>
    %34 = arith.subf %33, %4 : vector<8x1xf32>
    %35 = arith.mulf %34, %32 : vector<8x1xf32>
    %36 = arith.mulf %35, %28 : vector<8x1xf32>
    %c1_i32 = arith.constant 1 : i32
    %37 = arith.muli %arg0, %c1_i32 : i32
    %38 = arith.addi %37, %arg1 : i32
    %c8_i32 = arith.constant 8 : i32
    %39 = arith.muli %38, %c8_i32 : i32
    %40 = tpu.iota {dimensions = array<i32: 0>} : vector<8x1xi32>
    %41 = vector.broadcast %39 : i32 to vector<8x1xi32>
    %42 = arith.addi %41, %40 : vector<8x1xi32>
    %c0_11 = arith.constant 0 : index
    %43 = memref.load %arg2[%c0_11] : memref<1xi32, #tpu.memory_space<smem>>
    %44 = vector.broadcast %43 : i32 to vector<8x1xi32>
    %45 = arith.cmpi slt, %42, %44 : vector<8x1xi32>
    %cst_12 = arith.constant 0.000000e+00 : f32
    %46 = vector.broadcast %cst_12 : f32 to vector<8x1xf32>
    %47 = arith.select %45, %36, %46 : vector<8x1xi1>, vector<8x1xf32>
    %c0_13 = arith.constant 0 : index
    %c0_14 = arith.constant 0 : index
    %48 = vector.load %arg5[%c0_13, %c0_14] : memref<8x1xf32, #tpu.memory_space<vmem>>, vector<8x1xf32>
    %49 = arith.addf %48, %47 : vector<8x1xf32>
    %c0_15 = arith.constant 0 : index
    %c0_16 = arith.constant 0 : index
    %50 = vector.load %arg5[%c0_15, %c0_16] : memref<8x1xf32, #tpu.memory_space<vmem>>, vector<8x1xf32>
    tpu.vector_store %arg5[%c0_15, %c0_16], %49 {strides = array<i32>} : memref<8x1xf32, #tpu.memory_space<vmem>>, vector<8x1xf32>,
    return
  }
  func.func @transform_0(%arg0: i32, %arg1: i32, %arg2: memref<1xi32, #tpu.memory_space<smem>>) -> (i32, i32) {
    %c1_i32 = arith.constant 1 : i32
    %0 = arith.muli %arg0, %c1_i32 : i32
    %1 = arith.addi %0, %arg1 : i32
    %c0_i32 = arith.constant 0 : i32
    %2 = arith.minsi %1, %c0_i32 : i32
    %c0_i32_0 = arith.constant 0 : i32
    %c0_i32_1 = arith.constant 0 : i32
    return %2, %c0_i32_0 : i32, i32
  }
  func.func @transform_1(%arg0: i32, %arg1: i32, %arg2: memref<1xi32, #tpu.memory_space<smem>>) -> (i32, i32) {
    %c1_i32 = arith.constant 1 : i32
    %0 = arith.muli %arg0, %c1_i32 : i32
    %1 = arith.addi %0, %arg1 : i32
    %c0_i32 = arith.constant 0 : i32
    %2 = arith.minsi %1, %c0_i32 : i32
    %c0_i32_0 = arith.constant 0 : i32
    %c0_i32_1 = arith.constant 0 : i32
    return %2, %c0_i32_0 : i32, i32
  }
  func.func @transform_2(%arg0: i32, %arg1: i32, %arg2: memref<1xi32, #tpu.memory_space<smem>>) -> (i32, i32) {
    %c0_i32 = arith.constant 0 : i32
    %c0_i32_0 = arith.constant 0 : i32
    return %arg0, %c0_i32 : i32, i32
  }
}

</mosaic_0001>

<llo_original>
// kernel: tpu_custom_call.1
$region0: #{tpu_custom_call.1}
  #allocation0 [shape = 'u32[]', space=smem, size = 0x4, offset = 0x4, fixed_abs, tag = 'smem constant byte address 0x4 - core index']
  #allocation1 [shape = 'u32[72,128]{1,0:T(1,128)}', space=vmem, size = 0x9000, scoped, tag = 'internal scratch']
  #allocation2 [shape = 's32[1]{0}', space=sflag, size = 0x4, scoped, tag = 'scoped memory for tpu_custom_call.1']
  #allocation3 [shape = 's32[1]{0:T(128)S(6)}', space=smem, size = 0x200, scoped, tag = 'prefetched SMEM operand 0']
  %s0 = inlined_call_operand.<no memory space> [shape: s32[1], index: 0, kind: input, shape index: {}]
  %s1 = inlined_call_operand.vmem [shape: f32[8,32], index: 1, kind: input, shape index: {}]
  %s2 = inlined_call_operand.vmem [shape: f32[8,2], index: 2, kind: input, shape index: {}]
  %s3 = inlined_call_operand.vmem [shape: f32[8,1], index: 3, kind: output, shape index: {}]
  %s4 = sld [smem:[#allocation0]]
  $region22: #{tpu_custom_call.1} parent=0
    _
  %s6 = ssub.s32 1, %s4
  %s7 = scalar_select 0, %s6, %s4
  %8 = sst [smem:[#allocation3]] %s0
  // Predicated region
  $region2: #{tpu_custom_call.1} parent=0 // pred_check
    _
  $region3: #{tpu_custom_call.1} parent=0 // pred_check_branch
    %10 = sbr.rel (0) target = $region5
  $region4: #{tpu_custom_call.1} parent=0 // pred_region
    %s11 = sadd.s32 0, 0
    %p12 = scmp.lt.s32.totalorder %s11, 0
    %s13 = scalar_select %p12, %s11, 0
    %p14 = scmp.lt.s32.totalorder %s13, 0
    %s15 = scalar_select %p14, %s13, 0
    %s16 = smul.addr %s15, 8
    %s17 = scalar_lea.vmem %s1, %s16
    %s18 = sadd.s32 0, 0
    %p19 = scmp.lt.s32.totalorder %s18, 0
    %s20 = scalar_select %p19, %s18, 0
  $region5: #{tpu_custom_call.1} parent=0 // pred_fallthru
    _
  // Predicated region
  $region6: #{tpu_custom_call.1} parent=0 // pred_check
    _
  $region7: #{tpu_custom_call.1} parent=0 // pred_check_branch
    %22 = sbr.rel (0) target = $region9
  $region8: #{tpu_custom_call.1} parent=0 // pred_region
    %s23 = sadd.s32 0, 0
    %p24 = scmp.lt.s32.totalorder %s23, 0
    %s25 = scalar_select %p24, %s23, 0
    %p26 = scmp.lt.s32.totalorder %s25, 0
    %s27 = scalar_select %p26, %s25, 0
    %s28 = smul.addr %s27, 8
    %s29 = scalar_lea.vmem %s2, %s28
    %s30 = sadd.s32 0, 0
    %p31 = scmp.lt.s32.totalorder %s30, 0
    %s32 = scalar_select %p31, %s30, 0
  $region9: #{tpu_custom_call.1} parent=0 // pred_fallthru
    _
  %s33 = sadd.s32 0, 0
  %p34 = scmp.lt.s32.totalorder %s33, 0
  %s35 = scalar_select %p34, %s33, 0
  %p36 = scmp.lt.s32.totalorder %s35, 0
  %s37 = scalar_select %p36, %s35, 0
  %s38 = smul.addr %s37, 8
  %s39 = scalar_lea.vmem %s1, %s38
  %s40 = sadd.s32 0, 0
  %p41 = scmp.lt.s32.totalorder %s40, 0
  %s42 = scalar_select %p41, %s40, 0
  %p43 = scmp.lt.s32.totalorder %s42, 0
  %s44 = scalar_select %p43, %s42, 0
  %s45 = smul.addr %s44, 8
  %s46 = scalar_lea.vmem %s2, %s45
  %s47 = sadd.s32 0, 0
  %p48 = scmp.lt.s32.totalorder %s47, 0
  %s49 = scalar_select %p48, %s47, 0
  %p50 = scmp.lt.s32.totalorder %s49, 0
  %s51 = scalar_select %p50, %s49, 0
  %s52 = smul.addr %s51, 8
  %s53 = scalar_lea.vmem %s1, %s52
  %s54 = sadd.s32 0, 0
  %p55 = scmp.lt.s32.totalorder %s54, 0
  %s56 = scalar_select %p55, %s54, 0
  %s57 = sadd.s32 0, 0
  %p58 = scmp.lt.s32.totalorder %s57, 0
  %s59 = scalar_select %p58, %s57, 0
  %p60 = scmp.lt.s32.totalorder %s59, 0
  %s61 = scalar_select %p60, %s59, 0
  %s62 = smul.addr %s61, 8
  %s63 = scalar_lea.vmem %s2, %s62
  %s64 = sadd.s32 0, 0
  %p65 = scmp.lt.s32.totalorder %s64, 0
  %s66 = scalar_select %p65, %s64, 0
  %p67 = scmp.eq.s32.totalorder 0, 0
  // Predicated region
  $region10: #{tpu_custom_call.1} parent=0 // pred_check
    %p68 = pneg %p67
  $region11: #{tpu_custom_call.1} parent=0 // pred_check_branch
    %70 = sbr.rel (%p68) target = $region13
  $region12: #{tpu_custom_call.1} parent=0 // pred_region
    %vm71 = vcmask 7168
    %72 = vst.msk [vmem:[%s3] sm:$0xff] %vm71, 0.0
  $region13: #{tpu_custom_call.1} parent=0 // pred_fallthru
    _
  %v73 = vld [vmem:[%s53] sm:$0xff]
  %v74 = vld [vmem:[%s63] sm:$0xff]
  %v75 = vcvt.f32.s32.to.zero.pseudo %v74
  %v76 = vlaneseq
  %v77 = vand.u32 %v76, 127
  %78 = vset.pattern.permute.xlu0 1
  %79 = vperm.xlu0 %78, %v75
  %v80 = vpop.permute.xlu0 %79
  %vm81 = vcmp.eq.s32.totalorder %v77, %v80
  %vm82 = vcmask 261120
  %v83 = vsel %vm82, %v73, -inf
  %84 = vmax.xlane.f32.xlu0 %v83
  %v85 = vpop.xlane.xlu0 %84
  %v86 = vsel %vm81, %v73, 0.0
  %v87 = vsel %vm82, %v86, 0.0
  %88 = vadd.xlane.f32.xlu0 %v87
  %v89 = vpop.xlane.xlu0 %88
  %v90 = vsub.f32 %v73, %v85
  %v91 = vmul.f32 %v90, 1.442695
  %v92 = vpow.pop %v91
  %v93 = vsel %vm81, 0.0, %v92
  %v94 = vsel %vm82, %v93, 0.0
  %95 = vadd.xlane.f32.xlu0 %v94
  %v96 = vpop.xlane.xlu0 %95
  %v97 = vsub.f32 %v89, %v85
  %v98 = vmul.f32 %v97, 1.442695
  %v99 = vpow.pop %v98
  %v100 = vadd.f32 %v96, %v99
  %v101 = vlog2.pop %v100
  %v102 = vmul.f32 %v101, 0.6931472
  %v103 = vsub.f32 %v97, %v102
  %v104 = vrcp.pop %v100
  %v105 = vmul.f32 %v100, %v104
  %v106 = vsub.f32 1.0, %v105
  %v107 = vmul.f32 %v104, %v106
  %v108 = vadd.f32 %v104, %v107
  %vm109 = vweird.f32 %v100
  %vm110 = vweird.f32 %v104
  %vm111 = vmor %vm109, %vm110
  %v112 = vsel %vm111, %v104, %v108
  %v113 = vand.u32 2147483647, %v100
  %vm114 = vcmp.eq.f32.partialorder %v113, 8.507059e+37
  %v115 = vand.u32 %v100, 2147483648
  %v116 = vor.u32 1.1754944e-38, %v115
  %v117 = vsel %vm114, %v116, %v112
  %v118 = vmul.f32 %v96, %v117
  %v119 = vmul.f32 %v118, %v118
  %v120 = vsub.f32 0.0, %v74
  %v121 = vmul.f32 %v120, %v119
  %v122 = vmul.f32 %v121, %v103
  %s123 = sadd.s32 0, 0
  %s124 = smul.u32 %s123, 8
  %v125 = vlaneseq
  %v126 = vshrl.u32 %v125, 7
  %v127 = vstv %s124
  %v128 = vadd.s32 %v127, %v126
  %s129 = sld [smem:[#allocation3]]
  %v130 = vstv %s129
  %vm131 = vcmp.lt.s32.totalorder %v128, %v130
  %v132 = vsel %vm131, %v122, 0.0
  %v133 = vld [vmem:[%s3] sm:$0xff]
  %v134 = vadd.f32 %v133, %v132
  %vm135 = vcmask 7168
  %136 = vst.msk [vmem:[%s3] sm:$0xff] %vm135, %v134
  // Predicated region
  $region14: #{tpu_custom_call.1} parent=0 // pred_check
    _
  $region15: #{tpu_custom_call.1} parent=0 // pred_check_branch
    %138 = sbr.rel (0) target = $region17
  $region16: #{tpu_custom_call.1} parent=0 // pred_region
    _
  $region17: #{tpu_custom_call.1} parent=0 // pred_fallthru
    _
  // Predicated region
  $region18: #{tpu_custom_call.1} parent=0 // pred_check
    _
  $region19: #{tpu_custom_call.1} parent=0 // pred_check_branch
    %140 = sbr.rel (0) target = $region21
  $region20: #{tpu_custom_call.1} parent=0 // pred_region
    _
  $region21: #{tpu_custom_call.1} parent=0 // pred_fallthru
    _

</llo_original>
